<compile_context>
chip_gen: v6e
topology: v6e:2x2x1
jax: 0.10.0
libtpu: 0.0.40
codegen_flags: <defaults>
</compile_context>

<pallas_src>
import functools

import jax
import jax.numpy as jnp
import numpy as np
from jax.experimental import pallas as pl
from jax.experimental.pallas import tpu as pltpu

EPS_BN = 1e-5
THRESHOLD = 0.25          # MEANZ classifier threshold (from the module)

# ---- model hyper-parameters (small but consistent with the module structure) ----
B = 2                     # batch
C_IN, H_IN, W_IN = 3, 16, 16
D_IN = C_IN * H_IN * W_IN            # 768 flattened image
E = 256                   # face_embedd_size
P = 256                   # num_output_points (reduced from 2500 for the example)
NUM_AXIS = 3              # num_axis
PA = P * NUM_AXIS         # 768 = decoder MLP output width


def _fused_forward_kernel(x_ref, w1_ref, b1_ref, w2_ref, b2_ref,
                          pc_ref, meanz_ref):
    # x: (B, D_IN) f32.  Weights are bf16; accumulate in f32 on the MXU.
    x = x_ref[...].astype(jnp.bfloat16)

    # ---- [surrogate encoder folded into] Linear(E -> P) + BN1d(P) + ReLU ----
    h = jnp.dot(x, w1_ref[...],
                preferred_element_type=jnp.float32) + b1_ref[...]      # (B, P) f32
    h = jnp.maximum(h, 0.0)

    # ---- Linear(P -> P*A) + BN1d(P*A) + Tanh ----
    out = jnp.dot(h.astype(jnp.bfloat16), w2_ref[...],
                  preferred_element_type=jnp.float32) + b2_ref[...]    # (B, PA) f32
    pc = jnp.tanh(out)
    pc_ref[...] = pc.astype(pc_ref.dtype)

    # ---- MEANZ classifier: mean over points of the z coordinate ----
    # z coordinates live at flat lane indices p*NUM_AXIS + 2.  Generate the
    # selection mask in-kernel (VPU iota+compare, free slots) with the 1/P
    # normalization pre-folded into it.
    lane = jax.lax.broadcasted_iota(jnp.int32, (1, PA), 1)
    zmask = jnp.where(lane % NUM_AXIS == NUM_AXIS - 1,
                      jnp.float32(1.0 / P), jnp.float32(0.0))           # (1, PA)
    meanz_ref[...] = jnp.sum(pc * zmask, axis=1,
                             keepdims=True).astype(meanz_ref.dtype)     # (B, 1)


def make_params():
    key = jax.random.PRNGKey(0)
    k_enc, k_w1, k_w2, k_bn1, k_bn2 = jax.random.split(key, 5)

    # surrogate encoder weight
    w_enc = jax.random.normal(k_enc, (D_IN, E), jnp.float32) / np.sqrt(D_IN)

    # PyTorch-convention Linear weights (kaiming_normal_, mode='fan_out', relu)
    w1_pt = jax.random.normal(k_w1, (P, E), jnp.float32) * np.sqrt(2.0 / P)
    w2_pt = jax.random.normal(k_w2, (PA, P), jnp.float32) * np.sqrt(2.0 / PA)

    # BatchNorm1d parameters (non-trivial values so the fold is actually tested)
    def bn_params(k, n):
        kg, kb, km, kv = jax.random.split(k, 4)
        gamma = 1.0 + 0.1 * jax.random.normal(kg, (n,), jnp.float32)
        beta = 0.1 * jax.random.normal(kb, (n,), jnp.float32)
        mean = 0.1 * jax.random.normal(km, (n,), jnp.float32)
        var = jnp.abs(1.0 + 0.1 * jax.random.normal(kv, (n,), jnp.float32))
        return gamma, beta, mean, var

    bn1 = bn_params(k_bn1, P)
    bn2 = bn_params(k_bn2, PA)

    # Fold inference-mode BN into the preceding bias-free Linear.
    s1 = bn1[0] * jax.lax.rsqrt(bn1[3] + EPS_BN)          # (P,)
    b1 = bn1[1] - bn1[2] * s1                             # (P,)
    s2 = bn2[0] * jax.lax.rsqrt(bn2[3] + EPS_BN)          # (PA,)
    b2 = bn2[1] - bn2[2] * s2                             # (PA,)

    # Pre-fold the (linear) surrogate encoder into the first decoder layer:
    # x @ w_enc @ (w1_pt.T * s1)  ==  x @ w1_fused        (exact, done in f32)
    w1_fused = jnp.dot(w_enc, w1_pt.T * s1[None, :],
                       precision=jax.lax.Precision.HIGHEST)    # (D_IN, P)
    w2_fused = w2_pt.T * s2[None, :]                            # (P, PA)

    return dict(
        # kernel-layout parameters (BN + encoder folded, weights in bf16)
        w1=w1_fused.astype(jnp.bfloat16),       # (D_IN, P) bf16
        b1=b1[None, :].astype(jnp.float32),     # (1, P)    f32
        w2=w2_fused.astype(jnp.bfloat16),       # (P, PA)   bf16
        b2=b2[None, :].astype(jnp.float32),     # (1, PA)   f32
        # originals for the pure-JAX references
        w_enc=w_enc, w1_pt=w1_pt, w2_pt=w2_pt, bn1=bn1, bn2=bn2,
    )


@functools.partial(jax.jit, static_argnames=())
def forward(img, w1, b1, w2, b2):
    x_flat = img.reshape(B, -1).astype(jnp.float32)       # (B, D_IN)

    vmem = pl.BlockSpec(memory_space=pltpu.MemorySpace.VMEM)
    pc_flat, mean_z = pl.pallas_call(
        _fused_forward_kernel,
        in_specs=[vmem] * 5,
        out_specs=(vmem, vmem),
        out_shape=(
            jax.ShapeDtypeStruct((B, PA), jnp.float32),    # flat point cloud
            jax.ShapeDtypeStruct((B, 1), jnp.float32),     # mean_z
        ),
    )(x_flat, w1, b1, w2, b2)

    pred_pc = pc_flat.reshape(B, P, NUM_AXIS)              # PyTorch reshape(B, P, 3)
    mean_z = mean_z[:, 0]
    pred_label = (mean_z > THRESHOLD).astype(jnp.int32)    # trivial XLA elementwise
    return pred_pc, mean_z, pred_label


def reference_kernel_math(img, params):
    """Pure-JAX mirror of the kernel's numerics (bf16 matmul inputs, f32 accum)."""
    hi = jax.lax.Precision.HIGHEST
    x = img.reshape(B, -1).astype(jnp.float32)
    xb = x.astype(jnp.bfloat16)
    h = jnp.dot(xb, params["w1"], precision=hi,
                preferred_element_type=jnp.float32) + params["b1"]
    h = jnp.maximum(h, 0.0)
    out = jnp.dot(h.astype(jnp.bfloat16), params["w2"], precision=hi,
                  preferred_element_type=jnp.float32) + params["b2"]
    pc_flat = jnp.tanh(out)
    pred_pc = pc_flat.reshape(B, P, NUM_AXIS)
    mean_z = jnp.mean(pred_pc[:, :, NUM_AXIS - 1], axis=1)
    label = (mean_z > THRESHOLD).astype(jnp.int32)
    return pred_pc, mean_z, label


def reference_module(img, params):
    """Pure-JAX f32 reference of the original (unfused, unfolded) forward."""
    hi = jax.lax.Precision.HIGHEST
    x = img.reshape(B, -1).astype(jnp.float32)
    emb = jnp.dot(x, params["w_enc"], precision=hi)        # surrogate encoder

    def bn(x, p):
        g, b, m, v = p
        return (x - m[None, :]) * jax.lax.rsqrt(v[None, :] + EPS_BN) * g[None, :] + b[None, :]

    h = jnp.dot(emb, params["w1_pt"].T, precision=hi)
    h = jnp.maximum(bn(h, params["bn1"]), 0.0)
    out = jnp.dot(h, params["w2_pt"].T, precision=hi)
    pc_flat = jnp.tanh(bn(out, params["bn2"]))
    pred_pc = pc_flat.reshape(B, P, NUM_AXIS)
    mean_z = jnp.mean(pred_pc[:, :, NUM_AXIS - 1], axis=1)
    return pred_pc, mean_z


if __name__ == "__main__":
    params = make_params()
    img = jax.random.normal(jax.random.PRNGKey(0), (B, C_IN, H_IN, W_IN), jnp.float32)

    pred_pc, mean_z, label = forward(
        img, params["w1"], params["b1"], params["w2"], params["b2"])
    jax.block_until_ready((pred_pc, mean_z, label))

    assert pred_pc.shape == (B, P, NUM_AXIS)
    assert mean_z.shape == (B,)
    assert label.shape == (B,)

    # Exact-semantics check against a pure-JAX mirror of the kernel math.
    ref_pc, ref_mz, ref_lbl = reference_kernel_math(img, params)
    np.testing.assert_allclose(np.asarray(pred_pc), np.asarray(ref_pc),
                               rtol=1e-2, atol=1e-2)
    np.testing.assert_allclose(np.asarray(mean_z), np.asarray(ref_mz),
                               rtol=1e-2, atol=1e-2)
    np.testing.assert_array_equal(np.asarray(label), np.asarray(ref_lbl))

    # Looser check against the original full-f32 module semantics (bf16 weight
    # rounding is the only difference).
    full_pc, full_mz = reference_module(img, params)
    np.testing.assert_allclose(np.asarray(pred_pc), np.asarray(full_pc),
                               rtol=5e-2, atol=5e-2)
    np.testing.assert_allclose(np.asarray(mean_z), np.asarray(full_mz),
                               rtol=5e-2, atol=5e-2)

    print("KERNEL_OK")
</pallas_src>

<mosaic_0001>
module attributes {stable_mosaic.version = 11 : i64} {
  func.func @_fused_forward_kernel(%arg0: memref<2x768xf32, #tpu.memory_space<vmem>>, %arg1: memref<768x256xbf16, #tpu.memory_space<vmem>>, %arg2: memref<1x256xf32, #tpu.memory_space<vmem>>, %arg3: memref<256x768xbf16, #tpu.memory_space<vmem>>, %arg4: memref<1x768xf32, #tpu.memory_space<vmem>>, %arg5: memref<2x768xf32, #tpu.memory_space<vmem>>, %arg6: memref<2x1xf32, #tpu.memory_space<vmem>>) attributes {dimension_semantics = [], scalar_prefetch = 0 : i64, scratch_operands = 0 : i64, tpu.core_type = #tpu.core_type<tc>} {
    %c0 = arith.constant 0 : index
    %c0_0 = arith.constant 0 : index
    %0 = vector.load %arg0[%c0, %c0_0] : memref<2x768xf32, #tpu.memory_space<vmem>>, vector<2x768xf32>
    %1 = arith.truncf %0 : vector<2x768xf32> to vector<2x768xbf16>
    %c0_1 = arith.constant 0 : index
    %c0_2 = arith.constant 0 : index
    %2 = vector.load %arg1[%c0_1, %c0_2] : memref<768x256xbf16, #tpu.memory_space<vmem>>, vector<768x256xbf16>
    %cst = arith.constant dense<0.000000e+00> : vector<2x256xf32>
    %3 = tpu.matmul %1, %2, %cst {dimension_numbers = #tpu.dot_dimension_numbers<[1], [0], [0], [1], [0, 0, 1, 1], [], []>} : vector<2x768xbf16>, vector<768x256xbf16>, vector<2x256xf32> -> vector<2x256xf32>
    %c0_3 = arith.constant 0 : index
    %c0_4 = arith.constant 0 : index
    %4 = vector.load %arg2[%c0_3, %c0_4] : memref<1x256xf32, #tpu.memory_space<vmem>>, vector<1x256xf32>
    %5 = vector.broadcast %4 : vector<1x256xf32> to vector<2x256xf32>
    %6 = arith.addf %3, %5 : vector<2x256xf32>
    %cst_5 = arith.constant 0.000000e+00 : f32
    %7 = vector.broadcast %cst_5 : f32 to vector<2x256xf32>
    %8 = arith.maximumf %6, %7 : vector<2x256xf32>
    %9 = arith.truncf %8 : vector<2x256xf32> to vector<2x256xbf16>
    %c0_6 = arith.constant 0 : index
    %c0_7 = arith.constant 0 : index
    %10 = vector.load %arg3[%c0_6, %c0_7] : memref<256x768xbf16, #tpu.memory_space<vmem>>, vector<256x768xbf16>
    %cst_8 = arith.constant dense<0.000000e+00> : vector<2x768xf32>
    %11 = tpu.matmul %9, %10, %cst_8 {dimension_numbers = #tpu.dot_dimension_numbers<[1], [0], [0], [1], [0, 0, 1, 1], [], []>} : vector<2x256xbf16>, vector<256x768xbf16>, vector<2x768xf32> -> vector<2x768xf32>
    %c0_9 = arith.constant 0 : index
    %c0_10 = arith.constant 0 : index
    %12 = vector.load %arg4[%c0_9, %c0_10] : memref<1x768xf32, #tpu.memory_space<vmem>>, vector<1x768xf32>
    %13 = vector.broadcast %12 : vector<1x768xf32> to vector<2x768xf32>
    %14 = arith.addf %11, %13 : vector<2x768xf32>
    %15 = math.tanh %14 : vector<2x768xf32>
    %c0_11 = arith.constant 0 : index
    %c0_12 = arith.constant 0 : index
    %16 = vector.load %arg5[%c0_11, %c0_12] : memref<2x768xf32, #tpu.memory_space<vmem>>, vector<2x768xf32>
    tpu.vector_store %arg5[%c0_11, %c0_12], %15 {strides = array<i32>} : memref<2x768xf32, #tpu.memory_space<vmem>>, vector<2x768xf32>,
    %17 = tpu.iota {dimensions = array<i32: 1>} : vector<1x768xi32>
    %c3_i32 = arith.constant 3 : i32
    %c0_i32 = arith.constant 0 : i32
    %18 = arith.cmpi eq, %c3_i32, %c0_i32 : i32
    %c1_i32 = arith.constant 1 : i32
    %19 = arith.select %18, %c1_i32, %c3_i32 : i32
    %20 = vector.broadcast %19 : i32 to vector<1x768xi32>
    %21 = arith.remsi %17, %20 : vector<1x768xi32>
    %c0_i32_13 = arith.constant 0 : i32
    %22 = vector.broadcast %c0_i32_13 : i32 to vector<1x768xi32>
    %23 = arith.cmpi ne, %21, %22 : vector<1x768xi32>
    %c0_i32_14 = arith.constant 0 : i32
    %24 = vector.broadcast %c0_i32_14 : i32 to vector<1x768xi32>
    %25 = arith.cmpi slt, %21, %24 : vector<1x768xi32>
    %c0_i32_15 = arith.constant 0 : i32
    %26 = arith.cmpi slt, %19, %c0_i32_15 : i32
    %27 = vector.broadcast %26 : i1 to vector<1x768xi1>
    %28 = vector.broadcast %27 : vector<1x768xi1> to vector<1x768xi1>
    %29 = arith.xori %25, %28 : vector<1x768xi1>
    %30 = arith.andi %29, %23 : vector<1x768xi1>
    %31 = vector.broadcast %19 : i32 to vector<1x768xi32>
    %32 = arith.addi %21, %31 : vector<1x768xi32>
    %33 = arith.select %30, %32, %21 : vector<1x768xi1>, vector<1x768xi32>
    %c2_i32 = arith.constant 2 : i32
    %34 = vector.broadcast %c2_i32 : i32 to vector<1x768xi32>
    %35 = arith.cmpi eq, %33, %34 : vector<1x768xi32>
    %cst_16 = arith.constant 3.906250e-03 : f32
    %cst_17 = arith.constant 0.000000e+00 : f32
    %36 = vector.broadcast %cst_16 : f32 to vector<1x768xf32>
    %37 = vector.broadcast %cst_17 : f32 to vector<1x768xf32>
    %38 = arith.select %35, %36, %37 : vector<1x768xi1>, vector<1x768xf32>
    %39 = vector.broadcast %38 : vector<1x768xf32> to vector<2x768xf32>
    %40 = arith.mulf %15, %39 : vector<2x768xf32>
    %cst_18 = arith.constant dense<0.000000e+00> : vector<2xf32>
    %41 = vector.multi_reduction <add>, %40, %cst_18 [1] : vector<2x768xf32> to vector<2xf32>
    %42 = vector.shape_cast %41 : vector<2xf32> to vector<2x1xf32>
    %c0_19 = arith.constant 0 : index
    %c0_20 = arith.constant 0 : index
    %43 = vector.load %arg6[%c0_19, %c0_20] : memref<2x1xf32, #tpu.memory_space<vmem>>, vector<2x1xf32>
    tpu.vector_store %arg6[%c0_19, %c0_20], %42 {strides = array<i32>} : memref<2x1xf32, #tpu.memory_space<vmem>>, vector<2x1xf32>,
    return
  }
}

</mosaic_0001>

<llo_original>
// kernel: forward.1
$region0: #{forward.1}
  #allocation0 [shape = 'u32[]', space=smem, size = 0x4, offset = 0x4, fixed_abs, tag = 'smem constant byte address 0x4 - core index']
  #allocation1 [shape = 'u32[144,128]{1,0:T(1,128)}', space=vmem, size = 0x12000, scoped, tag = 'internal scratch']
  %s0 = inlined_call_operand.vmem [shape: f32[2,768], index: 0, kind: input, shape index: {}]
  %s1 = inlined_call_operand.hbm [shape: bf16[768,256], index: 1, kind: input, shape index: {}]
  %s2 = inlined_call_operand.vmem [shape: f32[1,256], index: 2, kind: input, shape index: {}]
  %s3 = inlined_call_operand.hbm [shape: bf16[256,768], index: 3, kind: input, shape index: {}]
  %s4 = inlined_call_operand.vmem [shape: f32[1,768], index: 4, kind: input, shape index: {}]
  %s5 = inlined_call_operand.vmem [shape: f32[2,768], index: 5, kind: output, shape index: {0}]
  %s6 = inlined_call_operand.vmem [shape: f32[2,1], index: 6, kind: output, shape index: {1}]
  %7 = xla_tuple %s5, %s6
  %s8 = sld [smem:[#allocation0]]
  $region46: #{forward.1} parent=0
    _
  %s10 = ssub.s32 1, %s8
  %s11 = scalar_select 0, %s10, %s8
  $region1: #{forward.1} parent=0
    #allocation2 [shape = 'u8[393216]{0}', space=vmem, size = 0x60000, scoped, tag = 'input window, operand 1, single buffered']
    #allocation3 [shape = 's32[1]{0}', space=sflag, size = 0x4, scoped, tag = 'scoped memory for forward.1']
    #allocation4 [shape = 'u8[393216]{0}', space=vmem, size = 0x60000, scoped, tag = 'input window, operand 3, single buffered']
    #allocation5 [shape = 's32[1]{0}', space=sflag, size = 0x4, scoped, tag = 'scoped memory for forward.1']
    %12 = vsyncpa [#allocation3], 0
    %13 = vsyncpa [#allocation5], 0
    // Predicated region
    $region2: #{forward.1} parent=1 // pred_check
      _
    $region3: #{forward.1} parent=1 // pred_check_branch
      %15 = sbr.rel (0) target = $region5
    $region4: #{forward.1} parent=1 // pred_region
      _
    $region5: #{forward.1} parent=1 // pred_fallthru
      _
    // Predicated region
    $region6: #{forward.1} parent=1 // pred_check
      _
    $region7: #{forward.1} parent=1 // pred_check_branch
      %17 = sbr.rel (0) target = $region9
    $region8: #{forward.1} parent=1 // pred_region
      %s19 = ssub.s32 12288, 12288
      %20 = vsyncadd [#allocation3], %s19
      %s21 = sshll.u32 [#allocation2], 4
      %s22 = int_to_ptr.vmem [resolvable:$true] %s21
      %27 = dma.hbm_to_vmem [thread:$0]  %s1, 12288, %s22, [#allocation3], 128, 128, 8
    $region9: #{forward.1} parent=1 // pred_fallthru
      _
    // Predicated region
    $region10: #{forward.1} parent=1 // pred_check
      _
    $region11: #{forward.1} parent=1 // pred_check_branch
      %29 = sbr.rel (0) target = $region13
    $region12: #{forward.1} parent=1 // pred_region
      _
    $region13: #{forward.1} parent=1 // pred_fallthru
      _
    // Predicated region
    $region14: #{forward.1} parent=1 // pred_check
      _
    $region15: #{forward.1} parent=1 // pred_check_branch
      %31 = sbr.rel (0) target = $region17
    $region16: #{forward.1} parent=1 // pred_region
      %s33 = ssub.s32 12288, 12288
      %34 = vsyncadd [#allocation5], %s33
      %s35 = sshll.u32 [#allocation4], 4
      %s36 = int_to_ptr.vmem [resolvable:$true] %s35
      %41 = dma.hbm_to_vmem [thread:$0]  %s3, 12288, %s36, [#allocation5], 384, 384, 24
    $region17: #{forward.1} parent=1 // pred_fallthru
      _
    // Predicated region
    $region18: #{forward.1} parent=1 // pred_check
      _
    $region19: #{forward.1} parent=1 // pred_check_branch
      %43 = sbr.rel (0) target = $region21
    $region20: #{forward.1} parent=1 // pred_region
      _
    $region21: #{forward.1} parent=1 // pred_fallthru
      _
    // Predicated region
    $region22: #{forward.1} parent=1 // pred_check
      _
    $region23: #{forward.1} parent=1 // pred_check_branch
      %45 = sbr.rel (0) target = $region25
    $region24: #{forward.1} parent=1 // pred_region
      %46 = dma.done [#allocation3], 12288
    $region25: #{forward.1} parent=1 // pred_fallthru
      _
    // Predicated region
    $region26: #{forward.1} parent=1 // pred_check
      _
    $region27: #{forward.1} parent=1 // pred_check_branch
      %48 = sbr.rel (0) target = $region29
    $region28: #{forward.1} parent=1 // pred_region
      %49 = dma.done [#allocation5], 12288
    $region29: #{forward.1} parent=1 // pred_fallthru
      _
    %v50 = vld [vmem:[%s0] sm:$0xff]
    %v51 = vld [vmem:[%s0 + $0x8] sm:$0xf]
    %v54 = vcombine.high %v50, %v50
    %v56 = vunpack.c.l.s4 1983009808
    %v57 = vunpack.c.0.s8 %v56
    %v58 = vlaneseq
    %v59 = vshrl.u32 %v58, 7
    %v60 = vsub.s32 %v57, %v59
    %v61 = vrot.slane %v50, %v60
    %v63 = vunpack.c.l.s4 1983009808
    %v64 = vunpack.c.0.s8 %v63
    %v65 = vlaneseq
    %v66 = vshrl.u32 %v65, 7
    %v67 = vsub.s32 %v64, %v66
    %v68 = vrot.slane %v54, %v67
    %v69 = vcombine.high %v61, %v61
    %v70 = vcombine.high %v68, %v68
    %v72 = vunpack.c.l.s4 1983009808
    %v73 = vunpack.c.0.s8 %v72
    %v74 = vlaneseq
    %v75 = vshrl.u32 %v74, 7
    %v76 = vsub.s32 %v73, %v75
    %v77 = vrot.slane %v51, %v76
    %v78 = vcombine.high %v77, %v77
    %v85 = vpack.c.bf16 %v61, %v61
    %v86 = vpack.c.bf16 %v69, %v69
    %v87 = vpack.c.bf16 %v68, %v68
    %v88 = vpack.c.bf16 %v70, %v70
    %v89 = vpack.c.bf16 %v77, %v77
    %v90 = vpack.c.bf16 %v78, %v78
    %v91 = vld [vmem:[#allocation2] sm:$0xff]
    %v92 = vld [vmem:[#allocation2 + $0x8] sm:$0xff]
    %v93 = vld [vmem:[#allocation2 + $0x10] sm:$0xff]
    %v94 = vld [vmem:[#allocation2 + $0x18] sm:$0xff]
    %v95 = vld [vmem:[#allocation2 + $0x20] sm:$0xff]
    %v96 = vld [vmem:[#allocation2 + $0x28] sm:$0xff]
    %v97 = vld [vmem:[#allocation2 + $0x30] sm:$0xff]
    %v98 = vld [vmem:[#allocation2 + $0x38] sm:$0xff]
    %v99 = vld [vmem:[#allocation2 + $0x40] sm:$0xff]
    %v100 = vld [vmem:[#allocation2 + $0x48] sm:$0xff]
    %v101 = vld [vmem:[#allocation2 + $0x50] sm:$0xff]
    %v102 = vld [vmem:[#allocation2 + $0x58] sm:$0xff]
    %v103 = vld [vmem:[#allocation2 + $0x60] sm:$0xff]
    %v104 = vld [vmem:[#allocation2 + $0x68] sm:$0xff]
    %v105 = vld [vmem:[#allocation2 + $0x70] sm:$0xff]
    %v106 = vld [vmem:[#allocation2 + $0x78] sm:$0xff]
    %v107 = vld [vmem:[#allocation2 + $0x80] sm:$0xff]
    %v108 = vld [vmem:[#allocation2 + $0x88] sm:$0xff]
    %v109 = vld [vmem:[#allocation2 + $0x90] sm:$0xff]
    %v110 = vld [vmem:[#allocation2 + $0x98] sm:$0xff]
    %v111 = vld [vmem:[#allocation2 + $0xa0] sm:$0xff]
    %v112 = vld [vmem:[#allocation2 + $0xa8] sm:$0xff]
    %v113 = vld [vmem:[#allocation2 + $0xb0] sm:$0xff]
    %v114 = vld [vmem:[#allocation2 + $0xb8] sm:$0xff]
    %v115 = vld [vmem:[#allocation2 + $0xc0] sm:$0xff]
    %v116 = vld [vmem:[#allocation2 + $0xc8] sm:$0xff]
    %v117 = vld [vmem:[#allocation2 + $0xd0] sm:$0xff]
    %v118 = vld [vmem:[#allocation2 + $0xd8] sm:$0xff]
    %v119 = vld [vmem:[#allocation2 + $0xe0] sm:$0xff]
    %v120 = vld [vmem:[#allocation2 + $0xe8] sm:$0xff]
    %v121 = vld [vmem:[#allocation2 + $0xf0] sm:$0xff]
    %v122 = vld [vmem:[#allocation2 + $0xf8] sm:$0xff]
    %v123 = vld [vmem:[#allocation2 + $0x100] sm:$0xff]
    %v124 = vld [vmem:[#allocation2 + $0x108] sm:$0xff]
    %v125 = vld [vmem:[#allocation2 + $0x110] sm:$0xff]
    %v126 = vld [vmem:[#allocation2 + $0x118] sm:$0xff]
    %v127 = vld [vmem:[#allocation2 + $0x120] sm:$0xff]
    %v128 = vld [vmem:[#allocation2 + $0x128] sm:$0xff]
    %v129 = vld [vmem:[#allocation2 + $0x130] sm:$0xff]
    %v130 = vld [vmem:[#allocation2 + $0x138] sm:$0xff]
    %v131 = vld [vmem:[#allocation2 + $0x140] sm:$0xff]
    %v132 = vld [vmem:[#allocation2 + $0x148] sm:$0xff]
    %v133 = vld [vmem:[#allocation2 + $0x150] sm:$0xff]
    %v134 = vld [vmem:[#allocation2 + $0x158] sm:$0xff]
    %v135 = vld [vmem:[#allocation2 + $0x160] sm:$0xff]
    %v136 = vld [vmem:[#allocation2 + $0x168] sm:$0xff]
    %v137 = vld [vmem:[#allocation2 + $0x170] sm:$0xff]
    %v138 = vld [vmem:[#allocation2 + $0x178] sm:$0xff]
    %v139 = vld [vmem:[#allocation2 + $0x180] sm:$0xff]
    %v140 = vld [vmem:[#allocation2 + $0x188] sm:$0xff]
    %v141 = vld [vmem:[#allocation2 + $0x190] sm:$0xff]
    %v142 = vld [vmem:[#allocation2 + $0x198] sm:$0xff]
    %v143 = vld [vmem:[#allocation2 + $0x1a0] sm:$0xff]
    %v144 = vld [vmem:[#allocation2 + $0x1a8] sm:$0xff]
    %v145 = vld [vmem:[#allocation2 + $0x1b0] sm:$0xff]
    %v146 = vld [vmem:[#allocation2 + $0x1b8] sm:$0xff]
    %v147 = vld [vmem:[#allocation2 + $0x1c0] sm:$0xff]
    %v148 = vld [vmem:[#allocation2 + $0x1c8] sm:$0xff]
    %v149 = vld [vmem:[#allocation2 + $0x1d0] sm:$0xff]
    %v150 = vld [vmem:[#allocation2 + $0x1d8] sm:$0xff]
    %v151 = vld [vmem:[#allocation2 + $0x1e0] sm:$0xff]
    %v152 = vld [vmem:[#allocation2 + $0x1e8] sm:$0xff]
    %v153 = vld [vmem:[#allocation2 + $0x1f0] sm:$0xff]
    %v154 = vld [vmem:[#allocation2 + $0x1f8] sm:$0xff]
    %v155 = vld [vmem:[#allocation2 + $0x200] sm:$0xff]
    %v156 = vld [vmem:[#allocation2 + $0x208] sm:$0xff]
    %v157 = vld [vmem:[#allocation2 + $0x210] sm:$0xff]
    %v158 = vld [vmem:[#allocation2 + $0x218] sm:$0xff]
    %v159 = vld [vmem:[#allocation2 + $0x220] sm:$0xff]
    %v160 = vld [vmem:[#allocation2 + $0x228] sm:$0xff]
    %v161 = vld [vmem:[#allocation2 + $0x230] sm:$0xff]
    %v162 = vld [vmem:[#allocation2 + $0x238] sm:$0xff]
    %v163 = vld [vmem:[#allocation2 + $0x240] sm:$0xff]
    %v164 = vld [vmem:[#allocation2 + $0x248] sm:$0xff]
    %v165 = vld [vmem:[#allocation2 + $0x250] sm:$0xff]
    %v166 = vld [vmem:[#allocation2 + $0x258] sm:$0xff]
    %v167 = vld [vmem:[#allocation2 + $0x260] sm:$0xff]
    %v168 = vld [vmem:[#allocation2 + $0x268] sm:$0xff]
    %v169 = vld [vmem:[#allocation2 + $0x270] sm:$0xff]
    %v170 = vld [vmem:[#allocation2 + $0x278] sm:$0xff]
    %v171 = vld [vmem:[#allocation2 + $0x280] sm:$0xff]
    %v172 = vld [vmem:[#allocation2 + $0x288] sm:$0xff]
    %v173 = vld [vmem:[#allocation2 + $0x290] sm:$0xff]
    %v174 = vld [vmem:[#allocation2 + $0x298] sm:$0xff]
    %v175 = vld [vmem:[#allocation2 + $0x2a0] sm:$0xff]
    %v176 = vld [vmem:[#allocation2 + $0x2a8] sm:$0xff]
    %v177 = vld [vmem:[#allocation2 + $0x2b0] sm:$0xff]
    %v178 = vld [vmem:[#allocation2 + $0x2b8] sm:$0xff]
    %v179 = vld [vmem:[#allocation2 + $0x2c0] sm:$0xff]
    %v180 = vld [vmem:[#allocation2 + $0x2c8] sm:$0xff]
    %v181 = vld [vmem:[#allocation2 + $0x2d0] sm:$0xff]
    %v182 = vld [vmem:[#allocation2 + $0x2d8] sm:$0xff]
    %v183 = vld [vmem:[#allocation2 + $0x2e0] sm:$0xff]
    %v184 = vld [vmem:[#allocation2 + $0x2e8] sm:$0xff]
    %v185 = vld [vmem:[#allocation2 + $0x2f0] sm:$0xff]
    %v186 = vld [vmem:[#allocation2 + $0x2f8] sm:$0xff]
    %v187 = vld [vmem:[%s2] sm:$0x3]
    %v189 = vlaneseq
    %v190 = vshrl.u32 %v189, 7
    %v191 = vsub.s32 0, %v190
    %v192 = vrot.slane %v187, %v191
    %v193 = vlaneseq
    %v194 = vshrl.u32 %v193, 7
    %v195 = vsub.s32 1, %v194
    %v196 = vrot.slane %v187, %v195
    %v295 = vunpack.c.l.b16 %v91
    %v296 = vunpack.c.h.b16 %v91
    %v297 = vunpack.c.l.b16 %v92
    %v298 = vunpack.c.h.b16 %v92
    %v299 = vunpack.c.l.b16 %v93
    %v300 = vunpack.c.h.b16 %v93
    %v301 = vunpack.c.l.b16 %v94
    %v302 = vunpack.c.h.b16 %v94
    %v303 = vunpack.c.l.b16 %v95
    %v304 = vunpack.c.h.b16 %v95
    %v305 = vunpack.c.l.b16 %v96
    %v306 = vunpack.c.h.b16 %v96
    %v307 = vunpack.c.l.b16 %v97
    %v308 = vunpack.c.h.b16 %v97
    %v309 = vunpack.c.l.b16 %v98
    %v310 = vunpack.c.h.b16 %v98
    %v311 = vunpack.c.l.b16 %v99
    %v312 = vunpack.c.h.b16 %v99
    %v313 = vunpack.c.l.b16 %v100
    %v314 = vunpack.c.h.b16 %v100
    %v315 = vunpack.c.l.b16 %v101
    %v316 = vunpack.c.h.b16 %v101
    %v317 = vunpack.c.l.b16 %v102
    %v318 = vunpack.c.h.b16 %v102
    %v319 = vunpack.c.l.b16 %v103
    %v320 = vunpack.c.h.b16 %v103
    %v321 = vunpack.c.l.b16 %v104
    %v322 = vunpack.c.h.b16 %v104
    %v323 = vunpack.c.l.b16 %v105
    %v324 = vunpack.c.h.b16 %v105
    %v325 = vunpack.c.l.b16 %v106
    %v326 = vunpack.c.h.b16 %v106
    %v327 = vunpack.c.l.b16 %v107
    %v328 = vunpack.c.h.b16 %v107
    %v329 = vunpack.c.l.b16 %v108
    %v330 = vunpack.c.h.b16 %v108
    %v331 = vunpack.c.l.b16 %v109
    %v332 = vunpack.c.h.b16 %v109
    %v333 = vunpack.c.l.b16 %v110
    %v334 = vunpack.c.h.b16 %v110
    %v335 = vunpack.c.l.b16 %v111
    %v336 = vunpack.c.h.b16 %v111
    %v337 = vunpack.c.l.b16 %v112
    %v338 = vunpack.c.h.b16 %v112
    %v339 = vunpack.c.l.b16 %v113
    %v340 = vunpack.c.h.b16 %v113
    %v341 = vunpack.c.l.b16 %v114
    %v342 = vunpack.c.h.b16 %v114
    %v343 = vunpack.c.l.b16 %v115
    %v344 = vunpack.c.h.b16 %v115
    %v345 = vunpack.c.l.b16 %v116
    %v346 = vunpack.c.h.b16 %v116
    %v347 = vunpack.c.l.b16 %v117
    %v348 = vunpack.c.h.b16 %v117
    %v349 = vunpack.c.l.b16 %v118
    %v350 = vunpack.c.h.b16 %v118
    %v351 = vunpack.c.l.b16 %v119
    %v352 = vunpack.c.h.b16 %v119
    %v353 = vunpack.c.l.b16 %v120
    %v354 = vunpack.c.h.b16 %v120
    %v355 = vunpack.c.l.b16 %v121
    %v356 = vunpack.c.h.b16 %v121
    %v357 = vunpack.c.l.b16 %v122
    %v358 = vunpack.c.h.b16 %v122
    %v359 = vunpack.c.l.b16 %v123
    %v360 = vunpack.c.h.b16 %v123
    %v361 = vunpack.c.l.b16 %v124
    %v362 = vunpack.c.h.b16 %v124
    %v363 = vunpack.c.l.b16 %v125
    %v364 = vunpack.c.h.b16 %v125
    %v365 = vunpack.c.l.b16 %v126
    %v366 = vunpack.c.h.b16 %v126
    %v367 = vunpack.c.l.b16 %v127
    %v368 = vunpack.c.h.b16 %v127
    %v369 = vunpack.c.l.b16 %v128
    %v370 = vunpack.c.h.b16 %v128
    %v371 = vunpack.c.l.b16 %v129
    %v372 = vunpack.c.h.b16 %v129
    %v373 = vunpack.c.l.b16 %v130
    %v374 = vunpack.c.h.b16 %v130
    %v375 = vunpack.c.l.b16 %v131
    %v376 = vunpack.c.h.b16 %v131
    %v377 = vunpack.c.l.b16 %v132
    %v378 = vunpack.c.h.b16 %v132
    %v379 = vunpack.c.l.b16 %v133
    %v380 = vunpack.c.h.b16 %v133
    %v381 = vunpack.c.l.b16 %v134
    %v382 = vunpack.c.h.b16 %v134
    %v383 = vunpack.c.l.b16 %v135
    %v384 = vunpack.c.h.b16 %v135
    %v385 = vunpack.c.l.b16 %v136
    %v386 = vunpack.c.h.b16 %v136
    %v387 = vunpack.c.l.b16 %v137
    %v388 = vunpack.c.h.b16 %v137
    %v389 = vunpack.c.l.b16 %v138
    %v390 = vunpack.c.h.b16 %v138
    %v391 = vunpack.c.l.b16 %v139
    %v392 = vunpack.c.h.b16 %v139
    %v393 = vunpack.c.l.b16 %v140
    %v394 = vunpack.c.h.b16 %v140
    %v395 = vunpack.c.l.b16 %v141
    %v396 = vunpack.c.h.b16 %v141
    %v397 = vunpack.c.l.b16 %v142
    %v398 = vunpack.c.h.b16 %v142
    %v399 = vunpack.c.l.b16 %v143
    %v400 = vunpack.c.h.b16 %v143
    %v401 = vunpack.c.l.b16 %v144
    %v402 = vunpack.c.h.b16 %v144
    %v403 = vunpack.c.l.b16 %v145
    %v404 = vunpack.c.h.b16 %v145
    %v405 = vunpack.c.l.b16 %v146
    %v406 = vunpack.c.h.b16 %v146
    %v407 = vunpack.c.l.b16 %v147
    %v408 = vunpack.c.h.b16 %v147
    %v409 = vunpack.c.l.b16 %v148
    %v410 = vunpack.c.h.b16 %v148
    %v411 = vunpack.c.l.b16 %v149
    %v412 = vunpack.c.h.b16 %v149
    %v413 = vunpack.c.l.b16 %v150
    %v414 = vunpack.c.h.b16 %v150
    %v415 = vunpack.c.l.b16 %v151
    %v416 = vunpack.c.h.b16 %v151
    %v417 = vunpack.c.l.b16 %v152
    %v418 = vunpack.c.h.b16 %v152
    %v419 = vunpack.c.l.b16 %v153
    %v420 = vunpack.c.h.b16 %v153
    %v421 = vunpack.c.l.b16 %v154
    %v422 = vunpack.c.h.b16 %v154
    %v423 = vunpack.c.l.b16 %v155
    %v424 = vunpack.c.h.b16 %v155
    %v425 = vunpack.c.l.b16 %v156
    %v426 = vunpack.c.h.b16 %v156
    %v427 = vunpack.c.l.b16 %v157
    %v428 = vunpack.c.h.b16 %v157
    %v429 = vunpack.c.l.b16 %v158
    %v430 = vunpack.c.h.b16 %v158
    %v431 = vunpack.c.l.b16 %v159
    %v432 = vunpack.c.h.b16 %v159
    %v433 = vunpack.c.l.b16 %v160
    %v434 = vunpack.c.h.b16 %v160
    %v435 = vunpack.c.l.b16 %v161
    %v436 = vunpack.c.h.b16 %v161
    %v437 = vunpack.c.l.b16 %v162
    %v438 = vunpack.c.h.b16 %v162
    %v439 = vunpack.c.l.b16 %v163
    %v440 = vunpack.c.h.b16 %v163
    %v441 = vunpack.c.l.b16 %v164
    %v442 = vunpack.c.h.b16 %v164
    %v443 = vunpack.c.l.b16 %v165
    %v444 = vunpack.c.h.b16 %v165
    %v445 = vunpack.c.l.b16 %v166
    %v446 = vunpack.c.h.b16 %v166
    %v447 = vunpack.c.l.b16 %v167
    %v448 = vunpack.c.h.b16 %v167
    %v449 = vunpack.c.l.b16 %v168
    %v450 = vunpack.c.h.b16 %v168
    %v451 = vunpack.c.l.b16 %v169
    %v452 = vunpack.c.h.b16 %v169
    %v453 = vunpack.c.l.b16 %v170
    %v454 = vunpack.c.h.b16 %v170
    %v455 = vunpack.c.l.b16 %v171
    %v456 = vunpack.c.h.b16 %v171
    %v457 = vunpack.c.l.b16 %v172
    %v458 = vunpack.c.h.b16 %v172
    %v459 = vunpack.c.l.b16 %v173
    %v460 = vunpack.c.h.b16 %v173
    %v461 = vunpack.c.l.b16 %v174
    %v462 = vunpack.c.h.b16 %v174
    %v463 = vunpack.c.l.b16 %v175
    %v464 = vunpack.c.h.b16 %v175
    %v465 = vunpack.c.l.b16 %v176
    %v466 = vunpack.c.h.b16 %v176
    %v467 = vunpack.c.l.b16 %v177
    %v468 = vunpack.c.h.b16 %v177
    %v469 = vunpack.c.l.b16 %v178
    %v470 = vunpack.c.h.b16 %v178
    %v471 = vunpack.c.l.b16 %v179
    %v472 = vunpack.c.h.b16 %v179
    %v473 = vunpack.c.l.b16 %v180
    %v474 = vunpack.c.h.b16 %v180
    %v475 = vunpack.c.l.b16 %v181
    %v476 = vunpack.c.h.b16 %v181
    %v477 = vunpack.c.l.b16 %v182
    %v478 = vunpack.c.h.b16 %v182
    %v479 = vunpack.c.l.b16 %v183
    %v480 = vunpack.c.h.b16 %v183
    %v481 = vunpack.c.l.b16 %v184
    %v482 = vunpack.c.h.b16 %v184
    %v483 = vunpack.c.l.b16 %v185
    %v484 = vunpack.c.h.b16 %v185
    %v485 = vunpack.c.l.b16 %v186
    %v486 = vunpack.c.h.b16 %v186
    %v487 = vpack.c.b16 %v297, %v295
    %v488 = vpack.c.b16 %v298, %v296
    %v489 = vpack.c.b16 %v301, %v299
    %v490 = vpack.c.b16 %v302, %v300
    %v491 = vpack.c.b16 %v305, %v303
    %v492 = vpack.c.b16 %v306, %v304
    %v493 = vpack.c.b16 %v309, %v307
    %v494 = vpack.c.b16 %v310, %v308
    %v495 = vpack.c.b16 %v313, %v311
    %v496 = vpack.c.b16 %v314, %v312
    %v497 = vpack.c.b16 %v317, %v315
    %v498 = vpack.c.b16 %v318, %v316
    %v499 = vpack.c.b16 %v321, %v319
    %v500 = vpack.c.b16 %v322, %v320
    %v501 = vpack.c.b16 %v325, %v323
    %v502 = vpack.c.b16 %v326, %v324
    %v503 = vpack.c.b16 %v329, %v327
    %v504 = vpack.c.b16 %v330, %v328
    %v505 = vpack.c.b16 %v333, %v331
    %v506 = vpack.c.b16 %v334, %v332
    %v507 = vpack.c.b16 %v337, %v335
    %v508 = vpack.c.b16 %v338, %v336
    %v509 = vpack.c.b16 %v341, %v339
    %v510 = vpack.c.b16 %v342, %v340
    %v511 = vpack.c.b16 %v345, %v343
    %v512 = vpack.c.b16 %v346, %v344
    %v513 = vpack.c.b16 %v349, %v347
    %v514 = vpack.c.b16 %v350, %v348
    %v515 = vpack.c.b16 %v353, %v351
    %v516 = vpack.c.b16 %v354, %v352
    %v517 = vpack.c.b16 %v357, %v355
    %v518 = vpack.c.b16 %v358, %v356
    %v519 = vpack.c.b16 %v361, %v359
    %v520 = vpack.c.b16 %v362, %v360
    %v521 = vpack.c.b16 %v365, %v363
    %v522 = vpack.c.b16 %v366, %v364
    %v523 = vpack.c.b16 %v369, %v367
    %v524 = vpack.c.b16 %v370, %v368
    %v525 = vpack.c.b16 %v373, %v371
    %v526 = vpack.c.b16 %v374, %v372
    %v527 = vpack.c.b16 %v377, %v375
    %v528 = vpack.c.b16 %v378, %v376
    %v529 = vpack.c.b16 %v381, %v379
    %v530 = vpack.c.b16 %v382, %v380
    %v531 = vpack.c.b16 %v385, %v383
    %v532 = vpack.c.b16 %v386, %v384
    %v533 = vpack.c.b16 %v389, %v387
    %v534 = vpack.c.b16 %v390, %v388
    %v535 = vpack.c.b16 %v393, %v391
    %v536 = vpack.c.b16 %v394, %v392
    %v537 = vpack.c.b16 %v397, %v395
    %v538 = vpack.c.b16 %v398, %v396
    %v539 = vpack.c.b16 %v401, %v399
    %v540 = vpack.c.b16 %v402, %v400
    %v541 = vpack.c.b16 %v405, %v403
    %v542 = vpack.c.b16 %v406, %v404
    %v543 = vpack.c.b16 %v409, %v407
    %v544 = vpack.c.b16 %v410, %v408
    %v545 = vpack.c.b16 %v413, %v411
    %v546 = vpack.c.b16 %v414, %v412
    %v547 = vpack.c.b16 %v417, %v415
    %v548 = vpack.c.b16 %v418, %v416
    %v549 = vpack.c.b16 %v421, %v419
    %v550 = vpack.c.b16 %v422, %v420
    %v551 = vpack.c.b16 %v425, %v423
    %v552 = vpack.c.b16 %v426, %v424
    %v553 = vpack.c.b16 %v429, %v427
    %v554 = vpack.c.b16 %v430, %v428
    %v555 = vpack.c.b16 %v433, %v431
    %v556 = vpack.c.b16 %v434, %v432
    %v557 = vpack.c.b16 %v437, %v435
    %v558 = vpack.c.b16 %v438, %v436
    %v559 = vpack.c.b16 %v441, %v439
    %v560 = vpack.c.b16 %v442, %v440
    %v561 = vpack.c.b16 %v445, %v443
    %v562 = vpack.c.b16 %v446, %v444
    %v563 = vpack.c.b16 %v449, %v447
    %v564 = vpack.c.b16 %v450, %v448
    %v565 = vpack.c.b16 %v453, %v451
    %v566 = vpack.c.b16 %v454, %v452
    %v567 = vpack.c.b16 %v457, %v455
    %v568 = vpack.c.b16 %v458, %v456
    %v569 = vpack.c.b16 %v461, %v459
    %v570 = vpack.c.b16 %v462, %v460
    %v571 = vpack.c.b16 %v465, %v463
    %v572 = vpack.c.b16 %v466, %v464
    %v573 = vpack.c.b16 %v469, %v467
    %v574 = vpack.c.b16 %v470, %v468
    %v575 = vpack.c.b16 %v473, %v471
    %v576 = vpack.c.b16 %v474, %v472
    %v577 = vpack.c.b16 %v477, %v475
    %v578 = vpack.c.b16 %v478, %v476
    %v579 = vpack.c.b16 %v481, %v479
    %v580 = vpack.c.b16 %v482, %v480
    %v581 = vpack.c.b16 %v485, %v483
    %v582 = vpack.c.b16 %v486, %v484
    %679 = vmatprep.subr.bf16.mxu0 %v502
    %680 = vmatpush1.bf16.msra.mxu0 %v501
    %681 = vmatprep.subr.bf16.mxu0 %v500
    %682 = vmatpush1.bf16.msra.mxu0 %v499
    %683 = vmatprep.subr.bf16.mxu0 %v498
    %684 = vmatpush1.bf16.msra.mxu0 %v497
    %685 = vmatprep.subr.bf16.mxu0 %v496
    %686 = vmatpush1.bf16.msra.mxu0 %v495
    %687 = vmatprep.subr.bf16.mxu0 %v494
    %688 = vmatpush1.bf16.msra.mxu0 %v493
    %689 = vmatprep.subr.bf16.mxu0 %v492
    %690 = vmatpush1.bf16.msra.mxu0 %v491
    %691 = vmatprep.subr.bf16.mxu0 %v490
    %692 = vmatpush1.bf16.msra.mxu0 %v489
    %693 = vmatprep.subr.bf16.mxu0 %v488
    %694 = vmatpush1.bf16.msra.mxu0 %v487
    %695 = vmatprep.subr.bf16.mxu0 %v518
    %696 = vmatpush2.bf16.msra.mxu0 %v517
    %697 = vmatprep.subr.bf16.mxu0 %v516
    %698 = vmatpush2.bf16.msra.mxu0 %v515
    %699 = vmatprep.subr.bf16.mxu0 %v514
    %700 = vmatpush2.bf16.msra.mxu0 %v513
    %701 = vmatprep.subr.bf16.mxu0 %v512
    %702 = vmatpush2.bf16.msra.mxu0 %v511
    %703 = vmatprep.subr.bf16.mxu0 %v510
    %704 = vmatpush2.bf16.msra.mxu0 %v509
    %705 = vmatprep.subr.bf16.mxu0 %v508
    %706 = vmatpush2.bf16.msra.mxu0 %v507
    %707 = vmatprep.subr.bf16.mxu0 %v506
    %708 = vmatpush2.bf16.msra.mxu0 %v505
    %709 = vmatprep.subr.bf16.mxu0 %v504
    %710 = vmatpush2.bf16.msra.mxu0 %v503
    %711 = vmatprep.mubr.bf16.mxu0 %v86
    %712 = vmatmul.mubr.bf16.gmra.mxu0 %v85
    %v713 = vpop.f32.mrf.mxu0
    %v714 = vadd.f32 %v192, %v713
    %v715 = vpop.f32.mrf.mxu0
    %v716 = vadd.f32 %v196, %v715
    %v717 = vpop.f32.mrf.mxu0
    %v718 = vpop.f32.mrf.mxu0
    %719 = vdwg.mxu0
    %720 = vmatprep.subr.bf16.mxu0 %v534
    %721 = vmatpush1.bf16.msra.mxu0 %v533
    %722 = vmatprep.subr.bf16.mxu0 %v532
    %723 = vmatpush1.bf16.msra.mxu0 %v531
    %724 = vmatprep.subr.bf16.mxu0 %v530
    %725 = vmatpush1.bf16.msra.mxu0 %v529
    %726 = vmatprep.subr.bf16.mxu0 %v528
    %727 = vmatpush1.bf16.msra.mxu0 %v527
    %728 = vmatprep.subr.bf16.mxu0 %v526
    %729 = vmatpush1.bf16.msra.mxu0 %v525
    %730 = vmatprep.subr.bf16.mxu0 %v524
    %731 = vmatpush1.bf16.msra.mxu0 %v523
    %732 = vmatprep.subr.bf16.mxu0 %v522
    %733 = vmatpush1.bf16.msra.mxu0 %v521
    %734 = vmatprep.subr.bf16.mxu0 %v520
    %735 = vmatpush1.bf16.msra.mxu0 %v519
    %736 = vmatprep.subr.bf16.mxu0 %v550
    %737 = vmatpush2.bf16.msra.mxu0 %v549
    %738 = vmatprep.subr.bf16.mxu0 %v548
    %739 = vmatpush2.bf16.msra.mxu0 %v547
    %740 = vmatprep.subr.bf16.mxu0 %v546
    %741 = vmatpush2.bf16.msra.mxu0 %v545
    %742 = vmatprep.subr.bf16.mxu0 %v544
    %743 = vmatpush2.bf16.msra.mxu0 %v543
    %744 = vmatprep.subr.bf16.mxu0 %v542
    %745 = vmatpush2.bf16.msra.mxu0 %v541
    %746 = vmatprep.subr.bf16.mxu0 %v540
    %747 = vmatpush2.bf16.msra.mxu0 %v539
    %748 = vmatprep.subr.bf16.mxu0 %v538
    %749 = vmatpush2.bf16.msra.mxu0 %v537
    %750 = vmatprep.subr.bf16.mxu0 %v536
    %751 = vmatpush2.bf16.msra.mxu0 %v535
    %752 = vmatprep.mubr.bf16.mxu0 %v88
    %753 = vmatmul.mubr.bf16.gmra.mxu0 %v87
    %v754 = vpop.f32.mrf.mxu0
    %v755 = vadd.f32 %v714, %v754
    %v756 = vpop.f32.mrf.mxu0
    %v757 = vadd.f32 %v716, %v756
    %v758 = vpop.f32.mrf.mxu0
    %v759 = vpop.f32.mrf.mxu0
    %760 = vdwg.mxu0
    %761 = vmatprep.subr.bf16.mxu0 %v566
    %762 = vmatpush1.bf16.msra.mxu0 %v565
    %763 = vmatprep.subr.bf16.mxu0 %v564
    %764 = vmatpush1.bf16.msra.mxu0 %v563
    %765 = vmatprep.subr.bf16.mxu0 %v562
    %766 = vmatpush1.bf16.msra.mxu0 %v561
    %767 = vmatprep.subr.bf16.mxu0 %v560
    %768 = vmatpush1.bf16.msra.mxu0 %v559
    %769 = vmatprep.subr.bf16.mxu0 %v558
    %770 = vmatpush1.bf16.msra.mxu0 %v557
    %771 = vmatprep.subr.bf16.mxu0 %v556
    %772 = vmatpush1.bf16.msra.mxu0 %v555
    %773 = vmatprep.subr.bf16.mxu0 %v554
    %774 = vmatpush1.bf16.msra.mxu0 %v553
    %775 = vmatprep.subr.bf16.mxu0 %v552
    %776 = vmatpush1.bf16.msra.mxu0 %v551
    %777 = vmatprep.subr.bf16.mxu0 %v582
    %778 = vmatpush2.bf16.msra.mxu0 %v581
    %779 = vmatprep.subr.bf16.mxu0 %v580
    %780 = vmatpush2.bf16.msra.mxu0 %v579
    %781 = vmatprep.subr.bf16.mxu0 %v578
    %782 = vmatpush2.bf16.msra.mxu0 %v577
    %783 = vmatprep.subr.bf16.mxu0 %v576
    %784 = vmatpush2.bf16.msra.mxu0 %v575
    %785 = vmatprep.subr.bf16.mxu0 %v574
    %786 = vmatpush2.bf16.msra.mxu0 %v573
    %787 = vmatprep.subr.bf16.mxu0 %v572
    %788 = vmatpush2.bf16.msra.mxu0 %v571
    %789 = vmatprep.subr.bf16.mxu0 %v570
    %790 = vmatpush2.bf16.msra.mxu0 %v569
    %791 = vmatprep.subr.bf16.mxu0 %v568
    %792 = vmatpush2.bf16.msra.mxu0 %v567
    %793 = vmatprep.mubr.bf16.mxu0 %v90
    %794 = vmatmul.mubr.bf16.gmra.mxu0 %v89
    %v795 = vpop.f32.mrf.mxu0
    %v796 = vadd.f32 %v755, %v795
    %v797 = vpop.f32.mrf.mxu0
    %v798 = vadd.f32 %v757, %v797
    %v799 = vpop.f32.mrf.mxu0
    %v800 = vpop.f32.mrf.mxu0
    %801 = vdwg.mxu0
    %v802 = vmax.f32 %v796, 0.0
    %v803 = vmax.f32 %v798, 0.0
    %v804 = vpack.c.bf16 %v802, %v802
    %v805 = vpack.c.bf16 %v803, %v803
    %v806 = vld [vmem:[#allocation4] sm:$0xff]
    %v807 = vld [vmem:[#allocation4 + $0x8] sm:$0xff]
    %v808 = vld [vmem:[#allocation4 + $0x10] sm:$0xff]
    %v809 = vld [vmem:[#allocation4 + $0x18] sm:$0xff]
    %v810 = vld [vmem:[#allocation4 + $0x20] sm:$0xff]
    %v811 = vld [vmem:[#allocation4 + $0x28] sm:$0xff]
    %v812 = vld [vmem:[#allocation4 + $0x30] sm:$0xff]
    %v813 = vld [vmem:[#allocation4 + $0x38] sm:$0xff]
    %v814 = vld [vmem:[#allocation4 + $0x40] sm:$0xff]
    %v815 = vld [vmem:[#allocation4 + $0x48] sm:$0xff]
    %v816 = vld [vmem:[#allocation4 + $0x50] sm:$0xff]
    %v817 = vld [vmem:[#allocation4 + $0x58] sm:$0xff]
    %v818 = vld [vmem:[#allocation4 + $0x60] sm:$0xff]
    %v819 = vld [vmem:[#allocation4 + $0x68] sm:$0xff]
    %v820 = vld [vmem:[#allocation4 + $0x70] sm:$0xff]
    %v821 = vld [vmem:[#allocation4 + $0x78] sm:$0xff]
    %v822 = vld [vmem:[#allocation4 + $0x80] sm:$0xff]
    %v823 = vld [vmem:[#allocation4 + $0x88] sm:$0xff]
    %v824 = vld [vmem:[#allocation4 + $0x90] sm:$0xff]
    %v825 = vld [vmem:[#allocation4 + $0x98] sm:$0xff]
    %v826 = vld [vmem:[#allocation4 + $0xa0] sm:$0xff]
    %v827 = vld [vmem:[#allocation4 + $0xa8] sm:$0xff]
    %v828 = vld [vmem:[#allocation4 + $0xb0] sm:$0xff]
    %v829 = vld [vmem:[#allocation4 + $0xb8] sm:$0xff]
    %v830 = vld [vmem:[#allocation4 + $0xc0] sm:$0xff]
    %v831 = vld [vmem:[#allocation4 + $0xc8] sm:$0xff]
    %v832 = vld [vmem:[#allocation4 + $0xd0] sm:$0xff]
    %v833 = vld [vmem:[#allocation4 + $0xd8] sm:$0xff]
    %v834 = vld [vmem:[#allocation4 + $0xe0] sm:$0xff]
    %v835 = vld [vmem:[#allocation4 + $0xe8] sm:$0xff]
    %v836 = vld [vmem:[#allocation4 + $0xf0] sm:$0xff]
    %v837 = vld [vmem:[#allocation4 + $0xf8] sm:$0xff]
    %v838 = vld [vmem:[#allocation4 + $0x100] sm:$0xff]
    %v839 = vld [vmem:[#allocation4 + $0x108] sm:$0xff]
    %v840 = vld [vmem:[#allocation4 + $0x110] sm:$0xff]
    %v841 = vld [vmem:[#allocation4 + $0x118] sm:$0xff]
    %v842 = vld [vmem:[#allocation4 + $0x120] sm:$0xff]
    %v843 = vld [vmem:[#allocation4 + $0x128] sm:$0xff]
    %v844 = vld [vmem:[#allocation4 + $0x130] sm:$0xff]
    %v845 = vld [vmem:[#allocation4 + $0x138] sm:$0xff]
    %v846 = vld [vmem:[#allocation4 + $0x140] sm:$0xff]
    %v847 = vld [vmem:[#allocation4 + $0x148] sm:$0xff]
    %v848 = vld [vmem:[#allocation4 + $0x150] sm:$0xff]
    %v849 = vld [vmem:[#allocation4 + $0x158] sm:$0xff]
    %v850 = vld [vmem:[#allocation4 + $0x160] sm:$0xff]
    %v851 = vld [vmem:[#allocation4 + $0x168] sm:$0xff]
    %v852 = vld [vmem:[#allocation4 + $0x170] sm:$0xff]
    %v853 = vld [vmem:[#allocation4 + $0x178] sm:$0xff]
    %v854 = vld [vmem:[#allocation4 + $0x180] sm:$0xff]
    %v855 = vld [vmem:[#allocation4 + $0x188] sm:$0xff]
    %v856 = vld [vmem:[#allocation4 + $0x190] sm:$0xff]
    %v857 = vld [vmem:[#allocation4 + $0x198] sm:$0xff]
    %v858 = vld [vmem:[#allocation4 + $0x1a0] sm:$0xff]
    %v859 = vld [vmem:[#allocation4 + $0x1a8] sm:$0xff]
    %v860 = vld [vmem:[#allocation4 + $0x1b0] sm:$0xff]
    %v861 = vld [vmem:[#allocation4 + $0x1b8] sm:$0xff]
    %v862 = vld [vmem:[#allocation4 + $0x1c0] sm:$0xff]
    %v863 = vld [vmem:[#allocation4 + $0x1c8] sm:$0xff]
    %v864 = vld [vmem:[#allocation4 + $0x1d0] sm:$0xff]
    %v865 = vld [vmem:[#allocation4 + $0x1d8] sm:$0xff]
    %v866 = vld [vmem:[#allocation4 + $0x1e0] sm:$0xff]
    %v867 = vld [vmem:[#allocation4 + $0x1e8] sm:$0xff]
    %v868 = vld [vmem:[#allocation4 + $0x1f0] sm:$0xff]
    %v869 = vld [vmem:[#allocation4 + $0x1f8] sm:$0xff]
    %v870 = vld [vmem:[#allocation4 + $0x200] sm:$0xff]
    %v871 = vld [vmem:[#allocation4 + $0x208] sm:$0xff]
    %v872 = vld [vmem:[#allocation4 + $0x210] sm:$0xff]
    %v873 = vld [vmem:[#allocation4 + $0x218] sm:$0xff]
    %v874 = vld [vmem:[#allocation4 + $0x220] sm:$0xff]
    %v875 = vld [vmem:[#allocation4 + $0x228] sm:$0xff]
    %v876 = vld [vmem:[#allocation4 + $0x230] sm:$0xff]
    %v877 = vld [vmem:[#allocation4 + $0x238] sm:$0xff]
    %v878 = vld [vmem:[#allocation4 + $0x240] sm:$0xff]
    %v879 = vld [vmem:[#allocation4 + $0x248] sm:$0xff]
    %v880 = vld [vmem:[#allocation4 + $0x250] sm:$0xff]
    %v881 = vld [vmem:[#allocation4 + $0x258] sm:$0xff]
    %v882 = vld [vmem:[#allocation4 + $0x260] sm:$0xff]
    %v883 = vld [vmem:[#allocation4 + $0x268] sm:$0xff]
    %v884 = vld [vmem:[#allocation4 + $0x270] sm:$0xff]
    %v885 = vld [vmem:[#allocation4 + $0x278] sm:$0xff]
    %v886 = vld [vmem:[#allocation4 + $0x280] sm:$0xff]
    %v887 = vld [vmem:[#allocation4 + $0x288] sm:$0xff]
    %v888 = vld [vmem:[#allocation4 + $0x290] sm:$0xff]
    %v889 = vld [vmem:[#allocation4 + $0x298] sm:$0xff]
    %v890 = vld [vmem:[#allocation4 + $0x2a0] sm:$0xff]
    %v891 = vld [vmem:[#allocation4 + $0x2a8] sm:$0xff]
    %v892 = vld [vmem:[#allocation4 + $0x2b0] sm:$0xff]
    %v893 = vld [vmem:[#allocation4 + $0x2b8] sm:$0xff]
    %v894 = vld [vmem:[#allocation4 + $0x2c0] sm:$0xff]
    %v895 = vld [vmem:[#allocation4 + $0x2c8] sm:$0xff]
    %v896 = vld [vmem:[#allocation4 + $0x2d0] sm:$0xff]
    %v897 = vld [vmem:[#allocation4 + $0x2d8] sm:$0xff]
    %v898 = vld [vmem:[#allocation4 + $0x2e0] sm:$0xff]
    %v899 = vld [vmem:[#allocation4 + $0x2e8] sm:$0xff]
    %v900 = vld [vmem:[#allocation4 + $0x2f0] sm:$0xff]
    %v901 = vld [vmem:[#allocation4 + $0x2f8] sm:$0xff]
    %v902 = vld [vmem:[%s4] sm:$0x3f]
    %v904 = vlaneseq
    %v905 = vshrl.u32 %v904, 7
    %v906 = vsub.s32 0, %v905
    %v907 = vrot.slane %v902, %v906
    %v908 = vlaneseq
    %v909 = vshrl.u32 %v908, 7
    %v910 = vsub.s32 1, %v909
    %v911 = vrot.slane %v902, %v910
    %v912 = vlaneseq
    %v913 = vshrl.u32 %v912, 7
    %v914 = vsub.s32 2, %v913
    %v915 = vrot.slane %v902, %v914
    %v916 = vlaneseq
    %v917 = vshrl.u32 %v916, 7
    %v918 = vsub.s32 3, %v917
    %v919 = vrot.slane %v902, %v918
    %v920 = vlaneseq
    %v921 = vshrl.u32 %v920, 7
    %v922 = vsub.s32 4, %v921
    %v923 = vrot.slane %v902, %v922
    %v924 = vlaneseq
    %v925 = vshrl.u32 %v924, 7
    %v926 = vsub.s32 5, %v925
    %v927 = vrot.slane %v902, %v926
    %v1030 = vunpack.c.l.b16 %v806
    %v1031 = vunpack.c.h.b16 %v806
    %v1032 = vunpack.c.l.b16 %v807
    %v1033 = vunpack.c.h.b16 %v807
    %v1034 = vunpack.c.l.b16 %v808
    %v1035 = vunpack.c.h.b16 %v808
    %v1036 = vunpack.c.l.b16 %v809
    %v1037 = vunpack.c.h.b16 %v809
    %v1038 = vunpack.c.l.b16 %v810
    %v1039 = vunpack.c.h.b16 %v810
    %v1040 = vunpack.c.l.b16 %v811
    %v1041 = vunpack.c.h.b16 %v811
    %v1042 = vunpack.c.l.b16 %v812
    %v1043 = vunpack.c.h.b16 %v812
    %v1044 = vunpack.c.l.b16 %v813
    %v1045 = vunpack.c.h.b16 %v813
    %v1046 = vunpack.c.l.b16 %v814
    %v1047 = vunpack.c.h.b16 %v814
    %v1048 = vunpack.c.l.b16 %v815
    %v1049 = vunpack.c.h.b16 %v815
    %v1050 = vunpack.c.l.b16 %v816
    %v1051 = vunpack.c.h.b16 %v816
    %v1052 = vunpack.c.l.b16 %v817
    %v1053 = vunpack.c.h.b16 %v817
    %v1054 = vunpack.c.l.b16 %v818
    %v1055 = vunpack.c.h.b16 %v818
    %v1056 = vunpack.c.l.b16 %v819
    %v1057 = vunpack.c.h.b16 %v819
    %v1058 = vunpack.c.l.b16 %v820
    %v1059 = vunpack.c.h.b16 %v820
    %v1060 = vunpack.c.l.b16 %v821
    %v1061 = vunpack.c.h.b16 %v821
    %v1062 = vunpack.c.l.b16 %v822
    %v1063 = vunpack.c.h.b16 %v822
    %v1064 = vunpack.c.l.b16 %v823
    %v1065 = vunpack.c.h.b16 %v823
    %v1066 = vunpack.c.l.b16 %v824
    %v1067 = vunpack.c.h.b16 %v824
    %v1068 = vunpack.c.l.b16 %v825
    %v1069 = vunpack.c.h.b16 %v825
    %v1070 = vunpack.c.l.b16 %v826
    %v1071 = vunpack.c.h.b16 %v826
    %v1072 = vunpack.c.l.b16 %v827
    %v1073 = vunpack.c.h.b16 %v827
    %v1074 = vunpack.c.l.b16 %v828
    %v1075 = vunpack.c.h.b16 %v828
    %v1076 = vunpack.c.l.b16 %v829
    %v1077 = vunpack.c.h.b16 %v829
    %v1078 = vunpack.c.l.b16 %v830
    %v1079 = vunpack.c.h.b16 %v830
    %v1080 = vunpack.c.l.b16 %v831
    %v1081 = vunpack.c.h.b16 %v831
    %v1082 = vunpack.c.l.b16 %v832
    %v1083 = vunpack.c.h.b16 %v832
    %v1084 = vunpack.c.l.b16 %v833
    %v1085 = vunpack.c.h.b16 %v833
    %v1086 = vunpack.c.l.b16 %v834
    %v1087 = vunpack.c.h.b16 %v834
    %v1088 = vunpack.c.l.b16 %v835
    %v1089 = vunpack.c.h.b16 %v835
    %v1090 = vunpack.c.l.b16 %v836
    %v1091 = vunpack.c.h.b16 %v836
    %v1092 = vunpack.c.l.b16 %v837
    %v1093 = vunpack.c.h.b16 %v837
    %v1094 = vunpack.c.l.b16 %v838
    %v1095 = vunpack.c.h.b16 %v838
    %v1096 = vunpack.c.l.b16 %v839
    %v1097 = vunpack.c.h.b16 %v839
    %v1098 = vunpack.c.l.b16 %v840
    %v1099 = vunpack.c.h.b16 %v840
    %v1100 = vunpack.c.l.b16 %v841
    %v1101 = vunpack.c.h.b16 %v841
    %v1102 = vunpack.c.l.b16 %v842
    %v1103 = vunpack.c.h.b16 %v842
    %v1104 = vunpack.c.l.b16 %v843
    %v1105 = vunpack.c.h.b16 %v843
    %v1106 = vunpack.c.l.b16 %v844
    %v1107 = vunpack.c.h.b16 %v844
    %v1108 = vunpack.c.l.b16 %v845
    %v1109 = vunpack.c.h.b16 %v845
    %v1110 = vunpack.c.l.b16 %v846
    %v1111 = vunpack.c.h.b16 %v846
    %v1112 = vunpack.c.l.b16 %v847
    %v1113 = vunpack.c.h.b16 %v847
    %v1114 = vunpack.c.l.b16 %v848
    %v1115 = vunpack.c.h.b16 %v848
    %v1116 = vunpack.c.l.b16 %v849
    %v1117 = vunpack.c.h.b16 %v849
    %v1118 = vunpack.c.l.b16 %v850
    %v1119 = vunpack.c.h.b16 %v850
    %v1120 = vunpack.c.l.b16 %v851
    %v1121 = vunpack.c.h.b16 %v851
    %v1122 = vunpack.c.l.b16 %v852
    %v1123 = vunpack.c.h.b16 %v852
    %v1124 = vunpack.c.l.b16 %v853
    %v1125 = vunpack.c.h.b16 %v853
    %v1126 = vunpack.c.l.b16 %v854
    %v1127 = vunpack.c.h.b16 %v854
    %v1128 = vunpack.c.l.b16 %v855
    %v1129 = vunpack.c.h.b16 %v855
    %v1130 = vunpack.c.l.b16 %v856
    %v1131 = vunpack.c.h.b16 %v856
    %v1132 = vunpack.c.l.b16 %v857
    %v1133 = vunpack.c.h.b16 %v857
    %v1134 = vunpack.c.l.b16 %v858
    %v1135 = vunpack.c.h.b16 %v858
    %v1136 = vunpack.c.l.b16 %v859
    %v1137 = vunpack.c.h.b16 %v859
    %v1138 = vunpack.c.l.b16 %v860
    %v1139 = vunpack.c.h.b16 %v860
    %v1140 = vunpack.c.l.b16 %v861
    %v1141 = vunpack.c.h.b16 %v861
    %v1142 = vunpack.c.l.b16 %v862
    %v1143 = vunpack.c.h.b16 %v862
    %v1144 = vunpack.c.l.b16 %v863
    %v1145 = vunpack.c.h.b16 %v863
    %v1146 = vunpack.c.l.b16 %v864
    %v1147 = vunpack.c.h.b16 %v864
    %v1148 = vunpack.c.l.b16 %v865
    %v1149 = vunpack.c.h.b16 %v865
    %v1150 = vunpack.c.l.b16 %v866
    %v1151 = vunpack.c.h.b16 %v866
    %v1152 = vunpack.c.l.b16 %v867
    %v1153 = vunpack.c.h.b16 %v867
    %v1154 = vunpack.c.l.b16 %v868
    %v1155 = vunpack.c.h.b16 %v868
    %v1156 = vunpack.c.l.b16 %v869
    %v1157 = vunpack.c.h.b16 %v869
    %v1158 = vunpack.c.l.b16 %v870
    %v1159 = vunpack.c.h.b16 %v870
    %v1160 = vunpack.c.l.b16 %v871
    %v1161 = vunpack.c.h.b16 %v871
    %v1162 = vunpack.c.l.b16 %v872
    %v1163 = vunpack.c.h.b16 %v872
    %v1164 = vunpack.c.l.b16 %v873
    %v1165 = vunpack.c.h.b16 %v873
    %v1166 = vunpack.c.l.b16 %v874
    %v1167 = vunpack.c.h.b16 %v874
    %v1168 = vunpack.c.l.b16 %v875
    %v1169 = vunpack.c.h.b16 %v875
    %v1170 = vunpack.c.l.b16 %v876
    %v1171 = vunpack.c.h.b16 %v876
    %v1172 = vunpack.c.l.b16 %v877
    %v1173 = vunpack.c.h.b16 %v877
    %v1174 = vunpack.c.l.b16 %v878
    %v1175 = vunpack.c.h.b16 %v878
    %v1176 = vunpack.c.l.b16 %v879
    %v1177 = vunpack.c.h.b16 %v879
    %v1178 = vunpack.c.l.b16 %v880
    %v1179 = vunpack.c.h.b16 %v880
    %v1180 = vunpack.c.l.b16 %v881
    %v1181 = vunpack.c.h.b16 %v881
    %v1182 = vunpack.c.l.b16 %v882
    %v1183 = vunpack.c.h.b16 %v882
    %v1184 = vunpack.c.l.b16 %v883
    %v1185 = vunpack.c.h.b16 %v883
    %v1186 = vunpack.c.l.b16 %v884
    %v1187 = vunpack.c.h.b16 %v884
    %v1188 = vunpack.c.l.b16 %v885
    %v1189 = vunpack.c.h.b16 %v885
    %v1190 = vunpack.c.l.b16 %v886
    %v1191 = vunpack.c.h.b16 %v886
    %v1192 = vunpack.c.l.b16 %v887
    %v1193 = vunpack.c.h.b16 %v887
    %v1194 = vunpack.c.l.b16 %v888
    %v1195 = vunpack.c.h.b16 %v888
    %v1196 = vunpack.c.l.b16 %v889
    %v1197 = vunpack.c.h.b16 %v889
    %v1198 = vunpack.c.l.b16 %v890
    %v1199 = vunpack.c.h.b16 %v890
    %v1200 = vunpack.c.l.b16 %v891
    %v1201 = vunpack.c.h.b16 %v891
    %v1202 = vunpack.c.l.b16 %v892
    %v1203 = vunpack.c.h.b16 %v892
    %v1204 = vunpack.c.l.b16 %v893
    %v1205 = vunpack.c.h.b16 %v893
    %v1206 = vunpack.c.l.b16 %v894
    %v1207 = vunpack.c.h.b16 %v894
    %v1208 = vunpack.c.l.b16 %v895
    %v1209 = vunpack.c.h.b16 %v895
    %v1210 = vunpack.c.l.b16 %v896
    %v1211 = vunpack.c.h.b16 %v896
    %v1212 = vunpack.c.l.b16 %v897
    %v1213 = vunpack.c.h.b16 %v897
    %v1214 = vunpack.c.l.b16 %v898
    %v1215 = vunpack.c.h.b16 %v898
    %v1216 = vunpack.c.l.b16 %v899
    %v1217 = vunpack.c.h.b16 %v899
    %v1218 = vunpack.c.l.b16 %v900
    %v1219 = vunpack.c.h.b16 %v900
    %v1220 = vunpack.c.l.b16 %v901
    %v1221 = vunpack.c.h.b16 %v901
    %v1222 = vpack.c.b16 %v1036, %v1030
    %v1223 = vpack.c.b16 %v1037, %v1031
    %v1224 = vpack.c.b16 %v1038, %v1032
    %v1225 = vpack.c.b16 %v1039, %v1033
    %v1226 = vpack.c.b16 %v1040, %v1034
    %v1227 = vpack.c.b16 %v1041, %v1035
    %v1228 = vpack.c.b16 %v1048, %v1042
    %v1229 = vpack.c.b16 %v1049, %v1043
    %v1230 = vpack.c.b16 %v1050, %v1044
    %v1231 = vpack.c.b16 %v1051, %v1045
    %v1232 = vpack.c.b16 %v1052, %v1046
    %v1233 = vpack.c.b16 %v1053, %v1047
    %v1234 = vpack.c.b16 %v1060, %v1054
    %v1235 = vpack.c.b16 %v1061, %v1055
    %v1236 = vpack.c.b16 %v1062, %v1056
    %v1237 = vpack.c.b16 %v1063, %v1057
    %v1238 = vpack.c.b16 %v1064, %v1058
    %v1239 = vpack.c.b16 %v1065, %v1059
    %v1240 = vpack.c.b16 %v1072, %v1066
    %v1241 = vpack.c.b16 %v1073, %v1067
    %v1242 = vpack.c.b16 %v1074, %v1068
    %v1243 = vpack.c.b16 %v1075, %v1069
    %v1244 = vpack.c.b16 %v1076, %v1070
    %v1245 = vpack.c.b16 %v1077, %v1071
    %v1246 = vpack.c.b16 %v1084, %v1078
    %v1247 = vpack.c.b16 %v1085, %v1079
    %v1248 = vpack.c.b16 %v1086, %v1080
    %v1249 = vpack.c.b16 %v1087, %v1081
    %v1250 = vpack.c.b16 %v1088, %v1082
    %v1251 = vpack.c.b16 %v1089, %v1083
    %v1252 = vpack.c.b16 %v1096, %v1090
    %v1253 = vpack.c.b16 %v1097, %v1091
    %v1254 = vpack.c.b16 %v1098, %v1092
    %v1255 = vpack.c.b16 %v1099, %v1093
    %v1256 = vpack.c.b16 %v1100, %v1094
    %v1257 = vpack.c.b16 %v1101, %v1095
    %v1258 = vpack.c.b16 %v1108, %v1102
    %v1259 = vpack.c.b16 %v1109, %v1103
    %v1260 = vpack.c.b16 %v1110, %v1104
    %v1261 = vpack.c.b16 %v1111, %v1105
    %v1262 = vpack.c.b16 %v1112, %v1106
    %v1263 = vpack.c.b16 %v1113, %v1107
    %v1264 = vpack.c.b16 %v1120, %v1114
    %v1265 = vpack.c.b16 %v1121, %v1115
    %v1266 = vpack.c.b16 %v1122, %v1116
    %v1267 = vpack.c.b16 %v1123, %v1117
    %v1268 = vpack.c.b16 %v1124, %v1118
    %v1269 = vpack.c.b16 %v1125, %v1119
    %v1270 = vpack.c.b16 %v1132, %v1126
    %v1271 = vpack.c.b16 %v1133, %v1127
    %v1272 = vpack.c.b16 %v1134, %v1128
    %v1273 = vpack.c.b16 %v1135, %v1129
    %v1274 = vpack.c.b16 %v1136, %v1130
    %v1275 = vpack.c.b16 %v1137, %v1131
    %v1276 = vpack.c.b16 %v1144, %v1138
    %v1277 = vpack.c.b16 %v1145, %v1139
    %v1278 = vpack.c.b16 %v1146, %v1140
    %v1279 = vpack.c.b16 %v1147, %v1141
    %v1280 = vpack.c.b16 %v1148, %v1142
    %v1281 = vpack.c.b16 %v1149, %v1143
    %v1282 = vpack.c.b16 %v1156, %v1150
    %v1283 = vpack.c.b16 %v1157, %v1151
    %v1284 = vpack.c.b16 %v1158, %v1152
    %v1285 = vpack.c.b16 %v1159, %v1153
    %v1286 = vpack.c.b16 %v1160, %v1154
    %v1287 = vpack.c.b16 %v1161, %v1155
    %v1288 = vpack.c.b16 %v1168, %v1162
    %v1289 = vpack.c.b16 %v1169, %v1163
    %v1290 = vpack.c.b16 %v1170, %v1164
    %v1291 = vpack.c.b16 %v1171, %v1165
    %v1292 = vpack.c.b16 %v1172, %v1166
    %v1293 = vpack.c.b16 %v1173, %v1167
    %v1294 = vpack.c.b16 %v1180, %v1174
    %v1295 = vpack.c.b16 %v1181, %v1175
    %v1296 = vpack.c.b16 %v1182, %v1176
    %v1297 = vpack.c.b16 %v1183, %v1177
    %v1298 = vpack.c.b16 %v1184, %v1178
    %v1299 = vpack.c.b16 %v1185, %v1179
    %v1300 = vpack.c.b16 %v1192, %v1186
    %v1301 = vpack.c.b16 %v1193, %v1187
    %v1302 = vpack.c.b16 %v1194, %v1188
    %v1303 = vpack.c.b16 %v1195, %v1189
    %v1304 = vpack.c.b16 %v1196, %v1190
    %v1305 = vpack.c.b16 %v1197, %v1191
    %v1306 = vpack.c.b16 %v1204, %v1198
    %v1307 = vpack.c.b16 %v1205, %v1199
    %v1308 = vpack.c.b16 %v1206, %v1200
    %v1309 = vpack.c.b16 %v1207, %v1201
    %v1310 = vpack.c.b16 %v1208, %v1202
    %v1311 = vpack.c.b16 %v1209, %v1203
    %v1312 = vpack.c.b16 %v1216, %v1210
    %v1313 = vpack.c.b16 %v1217, %v1211
    %v1314 = vpack.c.b16 %v1218, %v1212
    %v1315 = vpack.c.b16 %v1219, %v1213
    %v1316 = vpack.c.b16 %v1220, %v1214
    %v1317 = vpack.c.b16 %v1221, %v1215
    %1414 = vmatprep.subr.bf16.mxu0 %v1265
    %1415 = vmatpush1.bf16.msra.mxu0 %v1264
    %1416 = vmatprep.subr.bf16.mxu0 %v1259
    %1417 = vmatpush1.bf16.msra.mxu0 %v1258
    %1418 = vmatprep.subr.bf16.mxu0 %v1253
    %1419 = vmatpush1.bf16.msra.mxu0 %v1252
    %1420 = vmatprep.subr.bf16.mxu0 %v1247
    %1421 = vmatpush1.bf16.msra.mxu0 %v1246
    %1422 = vmatprep.subr.bf16.mxu0 %v1241
    %1423 = vmatpush1.bf16.msra.mxu0 %v1240
    %1424 = vmatprep.subr.bf16.mxu0 %v1235
    %1425 = vmatpush1.bf16.msra.mxu0 %v1234
    %1426 = vmatprep.subr.bf16.mxu0 %v1229
    %1427 = vmatpush1.bf16.msra.mxu0 %v1228
    %1428 = vmatprep.subr.bf16.mxu0 %v1223
    %1429 = vmatpush1.bf16.msra.mxu0 %v1222
    %1430 = vmatprep.subr.bf16.mxu0 %v1313
    %1431 = vmatpush2.bf16.msra.mxu0 %v1312
    %1432 = vmatprep.subr.bf16.mxu0 %v1307
    %1433 = vmatpush2.bf16.msra.mxu0 %v1306
    %1434 = vmatprep.subr.bf16.mxu0 %v1301
    %1435 = vmatpush2.bf16.msra.mxu0 %v1300
    %1436 = vmatprep.subr.bf16.mxu0 %v1295
    %1437 = vmatpush2.bf16.msra.mxu0 %v1294
    %1438 = vmatprep.subr.bf16.mxu0 %v1289
    %1439 = vmatpush2.bf16.msra.mxu0 %v1288
    %1440 = vmatprep.subr.bf16.mxu0 %v1283
    %1441 = vmatpush2.bf16.msra.mxu0 %v1282
    %1442 = vmatprep.subr.bf16.mxu0 %v1277
    %1443 = vmatpush2.bf16.msra.mxu0 %v1276
    %1444 = vmatprep.subr.bf16.mxu0 %v1271
    %1445 = vmatpush2.bf16.msra.mxu0 %v1270
    %1446 = vmatprep.mubr.bf16.mxu0 %v805
    %1447 = vmatmul.mubr.bf16.gmra.mxu0 %v804
    %v1448 = vpop.f32.mrf.mxu0
    %v1449 = vadd.f32 %v907, %v1448
    %v1450 = vpop.f32.mrf.mxu0
    %v1451 = vadd.f32 %v911, %v1450
    %v1452 = vpop.f32.mrf.mxu0
    %v1453 = vpop.f32.mrf.mxu0
    %1454 = vdwg.mxu0
    %1455 = vmatprep.subr.bf16.mxu0 %v1267
    %1456 = vmatpush1.bf16.msra.mxu0 %v1266
    %1457 = vmatprep.subr.bf16.mxu0 %v1261
    %1458 = vmatpush1.bf16.msra.mxu0 %v1260
    %1459 = vmatprep.subr.bf16.mxu0 %v1255
    %1460 = vmatpush1.bf16.msra.mxu0 %v1254
    %1461 = vmatprep.subr.bf16.mxu0 %v1249
    %1462 = vmatpush1.bf16.msra.mxu0 %v1248
    %1463 = vmatprep.subr.bf16.mxu0 %v1243
    %1464 = vmatpush1.bf16.msra.mxu0 %v1242
    %1465 = vmatprep.subr.bf16.mxu0 %v1237
    %1466 = vmatpush1.bf16.msra.mxu0 %v1236
    %1467 = vmatprep.subr.bf16.mxu0 %v1231
    %1468 = vmatpush1.bf16.msra.mxu0 %v1230
    %1469 = vmatprep.subr.bf16.mxu0 %v1225
    %1470 = vmatpush1.bf16.msra.mxu0 %v1224
    %1471 = vmatprep.subr.bf16.mxu0 %v1315
    %1472 = vmatpush2.bf16.msra.mxu0 %v1314
    %1473 = vmatprep.subr.bf16.mxu0 %v1309
    %1474 = vmatpush2.bf16.msra.mxu0 %v1308
    %1475 = vmatprep.subr.bf16.mxu0 %v1303
    %1476 = vmatpush2.bf16.msra.mxu0 %v1302
    %1477 = vmatprep.subr.bf16.mxu0 %v1297
    %1478 = vmatpush2.bf16.msra.mxu0 %v1296
    %1479 = vmatprep.subr.bf16.mxu0 %v1291
    %1480 = vmatpush2.bf16.msra.mxu0 %v1290
    %1481 = vmatprep.subr.bf16.mxu0 %v1285
    %1482 = vmatpush2.bf16.msra.mxu0 %v1284
    %1483 = vmatprep.subr.bf16.mxu0 %v1279
    %1484 = vmatpush2.bf16.msra.mxu0 %v1278
    %1485 = vmatprep.subr.bf16.mxu0 %v1273
    %1486 = vmatpush2.bf16.msra.mxu0 %v1272
    %1487 = vmatprep.mubr.bf16.mxu0 %v805
    %1488 = vmatmul.mubr.bf16.gmra.mxu0 %v804
    %v1489 = vpop.f32.mrf.mxu0
    %v1490 = vadd.f32 %v915, %v1489
    %v1491 = vpop.f32.mrf.mxu0
    %v1492 = vadd.f32 %v919, %v1491
    %v1493 = vpop.f32.mrf.mxu0
    %v1494 = vpop.f32.mrf.mxu0
    %1495 = vdwg.mxu0
    %1496 = vmatprep.subr.bf16.mxu0 %v1269
    %1497 = vmatpush1.bf16.msra.mxu0 %v1268
    %1498 = vmatprep.subr.bf16.mxu0 %v1263
    %1499 = vmatpush1.bf16.msra.mxu0 %v1262
    %1500 = vmatprep.subr.bf16.mxu0 %v1257
    %1501 = vmatpush1.bf16.msra.mxu0 %v1256
    %1502 = vmatprep.subr.bf16.mxu0 %v1251
    %1503 = vmatpush1.bf16.msra.mxu0 %v1250
    %1504 = vmatprep.subr.bf16.mxu0 %v1245
    %1505 = vmatpush1.bf16.msra.mxu0 %v1244
    %1506 = vmatprep.subr.bf16.mxu0 %v1239
    %1507 = vmatpush1.bf16.msra.mxu0 %v1238
    %1508 = vmatprep.subr.bf16.mxu0 %v1233
    %1509 = vmatpush1.bf16.msra.mxu0 %v1232
    %1510 = vmatprep.subr.bf16.mxu0 %v1227
    %1511 = vmatpush1.bf16.msra.mxu0 %v1226
    %1512 = vmatprep.subr.bf16.mxu0 %v1317
    %1513 = vmatpush2.bf16.msra.mxu0 %v1316
    %1514 = vmatprep.subr.bf16.mxu0 %v1311
    %1515 = vmatpush2.bf16.msra.mxu0 %v1310
    %1516 = vmatprep.subr.bf16.mxu0 %v1305
    %1517 = vmatpush2.bf16.msra.mxu0 %v1304
    %1518 = vmatprep.subr.bf16.mxu0 %v1299
    %1519 = vmatpush2.bf16.msra.mxu0 %v1298
    %1520 = vmatprep.subr.bf16.mxu0 %v1293
    %1521 = vmatpush2.bf16.msra.mxu0 %v1292
    %1522 = vmatprep.subr.bf16.mxu0 %v1287
    %1523 = vmatpush2.bf16.msra.mxu0 %v1286
    %1524 = vmatprep.subr.bf16.mxu0 %v1281
    %1525 = vmatpush2.bf16.msra.mxu0 %v1280
    %1526 = vmatprep.subr.bf16.mxu0 %v1275
    %1527 = vmatpush2.bf16.msra.mxu0 %v1274
    %1528 = vmatprep.mubr.bf16.mxu0 %v805
    %1529 = vmatmul.mubr.bf16.gmra.mxu0 %v804
    %v1530 = vpop.f32.mrf.mxu0
    %v1531 = vadd.f32 %v923, %v1530
    %v1532 = vpop.f32.mrf.mxu0
    %v1533 = vadd.f32 %v927, %v1532
    %v1534 = vpop.f32.mrf.mxu0
    %v1535 = vpop.f32.mrf.mxu0
    %1536 = vdwg.mxu0
    %v1537 = vtanh.pop %v1449
    %v1538 = vtanh.pop %v1451
    %v1539 = vtanh.pop %v1490
    %v1540 = vtanh.pop %v1492
    %v1541 = vtanh.pop %v1531
    %v1542 = vtanh.pop %v1533
    %v1549 = vcombine.low %v1537, %v1538
    %v1550 = vcombine.low %v1539, %v1540
    %v1552 = vunpack.c.l.s4 1983009808
    %v1553 = vunpack.c.0.s8 %v1552
    %v1554 = vlaneseq
    %v1555 = vshrl.u32 %v1554, 7
    %v1556 = vsub.s32 %v1553, %v1555
    %v1557 = vrot.slane %v1549, %v1556
    %v1559 = vunpack.c.l.s4 1983009808
    %v1560 = vunpack.c.0.s8 %v1559
    %v1561 = vlaneseq
    %v1562 = vshrl.u32 %v1561, 7
    %v1563 = vsub.s32 %v1560, %v1562
    %v1564 = vrot.slane %v1550, %v1563
    %v1565 = vcombine.low %v1557, %v1564
    %v1566 = vcombine.low %v1541, %v1542
    %v1568 = vunpack.c.l.s4 1983009808
    %v1569 = vunpack.c.0.s8 %v1568
    %v1570 = vlaneseq
    %v1571 = vshrl.u32 %v1570, 7
    %v1572 = vsub.s32 %v1569, %v1571
    %v1573 = vrot.slane %v1566, %v1572
    %1576 = vst [vmem:[%s5] sm:$0xff] %v1565
    %1577 = vst [vmem:[%s5 + $0x8] sm:$0xf] %v1573
    %v1578 = vlaneseq
    %v1579 = vand.u32 %v1578, 127
    %v1580 = vadd.s32 %v1579, 128
    %v1581 = vadd.s32 %v1579, 256
    %v1582 = vadd.s32 %v1579, 384
    %v1583 = vadd.s32 %v1579, 512
    %v1584 = vadd.s32 %v1579, 640
    %vm1585 = vcmp.lt.s32.totalorder %v1579, 0
    %v1586 = vsub.s32 0, %v1579
    %v1587 = vsel %vm1585, %v1586, %v1579
    %v1588 = vmul.u32.u64.compose %v1587, 2863311531
    %v1589 = vextract.low.u32 %v1588
    %v1590 = vextract.high.u32 %v1588
    %v1591 = vshrl.u32 %v1590, 1
    %v1592 = vmul.u32 %v1591, 3
    %v1593 = vsub.s32 %v1587, %v1592
    %v1594 = vsub.s32 0, %v1593
    %v1595 = vsel %vm1585, %v1594, %v1593
    %vm1596 = vcmp.lt.s32.totalorder %v1580, 0
    %v1597 = vsub.s32 0, %v1580
    %v1598 = vsel %vm1596, %v1597, %v1580
    %v1599 = vmul.u32.u64.compose %v1598, 2863311531
    %v1600 = vextract.low.u32 %v1599
    %v1601 = vextract.high.u32 %v1599
    %v1602 = vshrl.u32 %v1601, 1
    %v1603 = vmul.u32 %v1602, 3
    %v1604 = vsub.s32 %v1598, %v1603
    %v1605 = vsub.s32 0, %v1604
    %v1606 = vsel %vm1596, %v1605, %v1604
    %vm1607 = vcmp.lt.s32.totalorder %v1581, 0
    %v1608 = vsub.s32 0, %v1581
    %v1609 = vsel %vm1607, %v1608, %v1581
    %v1610 = vmul.u32.u64.compose %v1609, 2863311531
    %v1611 = vextract.low.u32 %v1610
    %v1612 = vextract.high.u32 %v1610
    %v1613 = vshrl.u32 %v1612, 1
    %v1614 = vmul.u32 %v1613, 3
    %v1615 = vsub.s32 %v1609, %v1614
    %v1616 = vsub.s32 0, %v1615
    %v1617 = vsel %vm1607, %v1616, %v1615
    %vm1618 = vcmp.lt.s32.totalorder %v1582, 0
    %v1619 = vsub.s32 0, %v1582
    %v1620 = vsel %vm1618, %v1619, %v1582
    %v1621 = vmul.u32.u64.compose %v1620, 2863311531
    %v1622 = vextract.low.u32 %v1621
    %v1623 = vextract.high.u32 %v1621
    %v1624 = vshrl.u32 %v1623, 1
    %v1625 = vmul.u32 %v1624, 3
    %v1626 = vsub.s32 %v1620, %v1625
    %v1627 = vsub.s32 0, %v1626
    %v1628 = vsel %vm1618, %v1627, %v1626
    %vm1629 = vcmp.lt.s32.totalorder %v1583, 0
    %v1630 = vsub.s32 0, %v1583
    %v1631 = vsel %vm1629, %v1630, %v1583
    %v1632 = vmul.u32.u64.compose %v1631, 2863311531
    %v1633 = vextract.low.u32 %v1632
    %v1634 = vextract.high.u32 %v1632
    %v1635 = vshrl.u32 %v1634, 1
    %v1636 = vmul.u32 %v1635, 3
    %v1637 = vsub.s32 %v1631, %v1636
    %v1638 = vsub.s32 0, %v1637
    %v1639 = vsel %vm1629, %v1638, %v1637
    %vm1640 = vcmp.lt.s32.totalorder %v1584, 0
    %v1641 = vsub.s32 0, %v1584
    %v1642 = vsel %vm1640, %v1641, %v1584
    %v1643 = vmul.u32.u64.compose %v1642, 2863311531
    %v1644 = vextract.low.u32 %v1643
    %v1645 = vextract.high.u32 %v1643
    %v1646 = vshrl.u32 %v1645, 1
    %v1647 = vmul.u32 %v1646, 3
    %v1648 = vsub.s32 %v1642, %v1647
    %v1649 = vsub.s32 0, %v1648
    %v1650 = vsel %vm1640, %v1649, %v1648
    %vm1651 = vcmp.ne.s32.totalorder %v1595, 0
    %vm1652 = vcmp.ne.s32.totalorder %v1606, 0
    %vm1653 = vcmp.ne.s32.totalorder %v1617, 0
    %vm1654 = vcmp.ne.s32.totalorder %v1628, 0
    %vm1655 = vcmp.ne.s32.totalorder %v1639, 0
    %vm1656 = vcmp.ne.s32.totalorder %v1650, 0
    %vm1657 = vcmp.lt.s32.totalorder %v1595, 0
    %vm1658 = vcmp.lt.s32.totalorder %v1606, 0
    %vm1659 = vcmp.lt.s32.totalorder %v1617, 0
    %vm1660 = vcmp.lt.s32.totalorder %v1628, 0
    %vm1661 = vcmp.lt.s32.totalorder %v1639, 0
    %vm1662 = vcmp.lt.s32.totalorder %v1650, 0
    %vm1663 = vmand %vm1657, %vm1651
    %vm1664 = vmand %vm1658, %vm1652
    %vm1665 = vmand %vm1659, %vm1653
    %vm1666 = vmand %vm1660, %vm1654
    %vm1667 = vmand %vm1661, %vm1655
    %vm1668 = vmand %vm1662, %vm1656
    %v1669 = vadd.s32 %v1595, 3
    %v1670 = vadd.s32 %v1606, 3
    %v1671 = vadd.s32 %v1617, 3
    %v1672 = vadd.s32 %v1628, 3
    %v1673 = vadd.s32 %v1639, 3
    %v1674 = vadd.s32 %v1650, 3
    %v1675 = vsel %vm1663, %v1669, %v1595
    %v1676 = vsel %vm1664, %v1670, %v1606
    %v1677 = vsel %vm1665, %v1671, %v1617
    %v1678 = vsel %vm1666, %v1672, %v1628
    %v1679 = vsel %vm1667, %v1673, %v1639
    %v1680 = vsel %vm1668, %v1674, %v1650
    %vm1681 = vcmp.eq.s32.totalorder %v1675, 2
    %vm1682 = vcmp.eq.s32.totalorder %v1676, 2
    %vm1683 = vcmp.eq.s32.totalorder %v1677, 2
    %vm1684 = vcmp.eq.s32.totalorder %v1678, 2
    %vm1685 = vcmp.eq.s32.totalorder %v1679, 2
    %vm1686 = vcmp.eq.s32.totalorder %v1680, 2
    %v1687 = vsel %vm1681, 0.00390625, 0.0
    %v1688 = vsel %vm1682, 0.00390625, 0.0
    %v1689 = vsel %vm1683, 0.00390625, 0.0
    %v1690 = vsel %vm1684, 0.00390625, 0.0
    %v1691 = vsel %vm1685, 0.00390625, 0.0
    %v1692 = vsel %vm1686, 0.00390625, 0.0
    %v1693 = vmul.f32 %v1537, %v1687
    %v1694 = vmul.f32 %v1538, %v1688
    %v1695 = vmul.f32 %v1539, %v1689
    %v1696 = vmul.f32 %v1540, %v1690
    %v1697 = vmul.f32 %v1541, %v1691
    %v1698 = vmul.f32 %v1542, %v1692
    %vm1699 = vcmask 1041408
    %v1700 = vsel %vm1699, %v1693, 0.0
    %v1701 = vsel %vm1699, %v1694, 0.0
    %v1702 = vadd.f32 %v1700, %v1701
    %v1703 = vsel %vm1699, %v1695, 0.0
    %v1704 = vadd.f32 %v1702, %v1703
    %v1705 = vsel %vm1699, %v1696, 0.0
    %v1706 = vadd.f32 %v1704, %v1705
    %v1707 = vsel %vm1699, %v1697, 0.0
    %v1708 = vadd.f32 %v1706, %v1707
    %v1709 = vsel %vm1699, %v1698, 0.0
    %v1710 = vadd.f32 %v1708, %v1709
    %1711 = vadd.xlane.f32.xlu0 %v1710
    %v1712 = vpop.xlane.xlu0 %1711
    %vm1713 = vcmask 1024
    %1714 = vst.msk [vmem:[%s6] sm:$0x3] %vm1713, %v1712
    // Predicated region
    $region30: #{forward.1} parent=1 // pred_check
      _
    $region31: #{forward.1} parent=1 // pred_check_branch
      %1716 = sbr.rel (0) target = $region33
    $region32: #{forward.1} parent=1 // pred_region
      _
    $region33: #{forward.1} parent=1 // pred_fallthru
      _
    // Predicated region
    $region34: #{forward.1} parent=1 // pred_check
      _
    $region35: #{forward.1} parent=1 // pred_check_branch
      %1718 = sbr.rel (0) target = $region37
    $region36: #{forward.1} parent=1 // pred_region
      _
    $region37: #{forward.1} parent=1 // pred_fallthru
      _
    // Predicated region
    $region38: #{forward.1} parent=1 // pred_check
      _
    $region39: #{forward.1} parent=1 // pred_check_branch
      %1720 = sbr.rel (0) target = $region41
    $region40: #{forward.1} parent=1 // pred_region
      _
    $region41: #{forward.1} parent=1 // pred_fallthru
      _
    // Predicated region
    $region42: #{forward.1} parent=1 // pred_check
      _
    $region43: #{forward.1} parent=1 // pred_check_branch
      %1722 = sbr.rel (0) target = $region45
    $region44: #{forward.1} parent=1 // pred_region
      _
    $region45: #{forward.1} parent=1 // pred_fallthru
      _
    %1723 = vsyncpa [#allocation3], 1
    %1724 = vsyncpa [#allocation5], 1

</llo_original>
